<compile_context>
chip_gen: v7x
topology: tpu7x:2x2x1
jax: 0.10.0
libtpu: 0.0.40
codegen_flags: <defaults>
</compile_context>

<pallas_src>
import math

import jax
import jax.numpy as jnp
from jax.experimental import pallas as pl
from jax.experimental.pallas import tpu as pltpu


_LANE = 128
_VMEM_BUDGET = 32 * 1024 * 1024   # conservative: also fits v7x's smaller VMEM
_VMEM_LIMIT = 64 * 1024 * 1024


def _round_up(x, m):
    return (x + m - 1) // m * m


def _choose_tm(M, row_bytes, fixed_bytes, sublane):
    """Largest row tile whose double-buffered tiles (+ resident weights) fit the
    VMEM budget, preferring >= 2 grid steps so both v7x TensorCores get work."""
    candidates = [t for t in (1024, 512, 256, 128, 64, 32, 16, 8)
                  if t % sublane == 0]
    tm = candidates[-1]
    for t in candidates:
        if 2 * t * row_bytes + fixed_bytes <= _VMEM_BUDGET:
            tm = t
            break
    while tm > sublane and pl.cdiv(M, tm) < 2:
        tm //= 2
    return tm


def _dense_kernel(x_ref, wt_ref, b_ref, o_ref):
    # MXU matmul (f32 accumulation) fused with bias + relu + exp(-x).
    z = jnp.dot(x_ref[...], wt_ref[...], preferred_element_type=jnp.float32)
    z = z + b_ref[...]                              # (tm, Np) + (1, Np) broadcast
    o_ref[...] = jnp.exp(-jnp.maximum(z, 0.0)).astype(o_ref.dtype)


def _diag_kernel(x_ref, w_ref, b_ref, o_ref):
    # Elementwise path for diag=True: per-lane multiply + bias + relu + exp.
    z = x_ref[...].astype(jnp.float32) * w_ref[...] + b_ref[...]
    o_ref[...] = jnp.exp(-jnp.maximum(z, 0.0)).astype(o_ref.dtype)


def temporal_decay(delta, W, b, diag=False, *, tm=None, compute_dtype=None):
    """delta: (B, S, K); W: (N, K); b: (N,). Returns gamma: (B, S, N).

    compute_dtype: optional dtype (e.g. jnp.bfloat16) for the matmul operands
    (dense path only); accumulation and the epilogue stay in f32.
    """
    B, S, K = delta.shape
    N = W.shape[0]
    M = B * S
    out_dtype = delta.dtype
    out_itemsize = jnp.dtype(out_dtype).itemsize
    x2d = delta.reshape(M, K)

    if diag:
        assert K == N, "diag=True requires input_size == output_size"
        # Only the diagonal of W participates: gamma = exp(-relu(delta*diag(W)+b)).
        # Pure VPU/EUP elementwise kernel -- no dense KxK weight, no MXU.
        w_row = jnp.diagonal(W).reshape(1, K).astype(jnp.float32)
        b_row = b.reshape(1, K).astype(jnp.float32)

        sublane = 8
        row_bytes = K * x2d.dtype.itemsize + K * out_itemsize
        fixed_bytes = 2 * 2 * 8 * K * 4          # double-buffered w/b, sublane-padded
        tm_ = tm or _choose_tm(M, row_bytes, fixed_bytes, sublane)
        M_pad = _round_up(M, tm_)
        if M_pad != M:
            x2d = jnp.pad(x2d, ((0, M_pad - M), (0, 0)))

        # TODO(synk): for K < 128 a wrapper-side (M, K)->(M/f, K*f) fold would make
        # loads/stores fully lane-dense; skipped to keep the general-K path simple.
        cost = pl.CostEstimate(
            flops=4 * M * K,
            transcendentals=M * K,
            bytes_accessed=(x2d.dtype.itemsize + out_itemsize) * M * K + 8 * K,
        )
        out2d = pl.pallas_call(
            _diag_kernel,
            out_shape=jax.ShapeDtypeStruct((M_pad, K), out_dtype),
            grid_spec=pltpu.PrefetchScalarGridSpec(
                num_scalar_prefetch=0,
                grid=(M_pad // tm_,),
                in_specs=[
                    pl.BlockSpec((tm_, K), lambda i: (i, 0)),   # rows of delta
                    pl.BlockSpec((1, K), lambda i: (0, 0)),     # diag(W)
                    pl.BlockSpec((1, K), lambda i: (0, 0)),     # bias
                ],
                out_specs=pl.BlockSpec((tm_, K), lambda i: (i, 0)),
            ),
            compiler_params=pltpu.CompilerParams(
                dimension_semantics=("parallel",),
                vmem_limit_bytes=_VMEM_LIMIT,
            ),
            cost_estimate=cost,
        )(x2d, w_row, b_row)
        return out2d[:M, :].reshape(B, S, N)

    # ---------------- dense (diag=False) path ----------------
    in_dtype = jnp.dtype(compute_dtype) if compute_dtype is not None else x2d.dtype
    sublane = 16 if in_dtype.itemsize == 2 else 8

    # Lane-dense output: zero-pad N up to a multiple of 128 (padded cols -> exp(0)=1,
    # sliced off below).  Pure layout plumbing, no extra compute on real columns.
    N_pad = _round_up(N, _LANE)
    wt = W.T.astype(in_dtype)                       # (K, N)
    b_f32 = b.astype(jnp.float32)
    if N_pad != N:
        wt = jnp.pad(wt, ((0, 0), (0, N_pad - N)))
        b_f32 = jnp.pad(b_f32, (0, N_pad - N))
    b_row = b_f32.reshape(1, N_pad)
    x2d = x2d.astype(in_dtype)

    row_bytes = K * in_dtype.itemsize + N_pad * out_itemsize
    fixed_bytes = 2 * (K * N_pad * in_dtype.itemsize + 8 * N_pad * 4)  # resident W^T, bias
    tm_ = tm or _choose_tm(M, row_bytes, fixed_bytes, sublane)
    M_pad = _round_up(M, tm_)
    if M_pad != M:
        x2d = jnp.pad(x2d, ((0, M_pad - M), (0, 0)))  # padded rows are zeros, sliced off

    cost = pl.CostEstimate(
        flops=2 * M * K * N,
        transcendentals=M * N,
        bytes_accessed=in_dtype.itemsize * (M * K + K * N) + out_itemsize * M * N,
    )

    out2d = pl.pallas_call(
        _dense_kernel,
        out_shape=jax.ShapeDtypeStruct((M_pad, N_pad), out_dtype),
        grid_spec=pltpu.PrefetchScalarGridSpec(
            num_scalar_prefetch=0,
            grid=(M_pad // tm_,),
            in_specs=[
                pl.BlockSpec((tm_, K), lambda i: (i, 0)),     # rows of delta
                pl.BlockSpec((K, N_pad), lambda i: (0, 0)),   # full W^T (grid-invariant)
                pl.BlockSpec((1, N_pad), lambda i: (0, 0)),   # bias
            ],
            out_specs=pl.BlockSpec((tm_, N_pad), lambda i: (i, 0)),
        ),
        compiler_params=pltpu.CompilerParams(
            dimension_semantics=("parallel",),
            vmem_limit_bytes=_VMEM_LIMIT,
        ),
        cost_estimate=cost,
    )(x2d, wt, b_row)

    return out2d[:M, :N].reshape(B, S, N)


def _reference(delta, W, b, diag=False):
    if diag:
        W = W * jnp.eye(W.shape[0], dtype=W.dtype)
    z = jnp.einsum("bsk,nk->bsn", delta, W) + b
    return jnp.exp(-jnp.maximum(z, 0.0))


if __name__ == "__main__":
    # Small shapes implied by the forward: [batch, seq, feature].
    batch, seq, input_size, output_size = 2, 8, 32, 32

    key = jax.random.PRNGKey(0)
    k_delta, k_w, k_b = jax.random.split(key, 3)

    # Deterministic parameter init mirroring _reset_parameters:
    # uniform(-std, std) with std = 1/sqrt(output_size).
    std = 1.0 / math.sqrt(output_size)
    W = jax.random.uniform(k_w, (output_size, input_size),
                           minval=-std, maxval=std, dtype=jnp.float32)
    b = jax.random.uniform(k_b, (output_size,),
                           minval=-std, maxval=std, dtype=jnp.float32)

    # Time-gap input (non-negative, like real deltas).
    delta = jax.random.uniform(k_delta, (batch, seq, input_size),
                               minval=0.0, maxval=5.0, dtype=jnp.float32)

    ok = True

    # f32 path: diag=False (MXU) and diag=True (elementwise).
    for diag in (False, True):
        gamma = jax.block_until_ready(temporal_decay(delta, W, b, diag=diag))
        ref = _reference(delta, W, b, diag=diag)
        ok &= gamma.shape == (batch, seq, output_size)
        ok &= bool(jnp.allclose(gamma, ref, atol=1e-5, rtol=1e-5))
        ok &= bool(jnp.all(gamma > 0.0) and jnp.all(gamma <= 1.0))

    # Ragged M (batch*seq not a multiple of the row tile) exercises the padding path.
    delta_ragged = jax.random.uniform(jax.random.PRNGKey(1), (3, 5, input_size),
                                      minval=0.0, maxval=5.0, dtype=jnp.float32)
    gamma_r = jax.block_until_ready(temporal_decay(delta_ragged, W, b, diag=False))
    ok &= gamma_r.shape == (3, 5, output_size)
    ok &= bool(jnp.allclose(gamma_r, _reference(delta_ragged, W, b), atol=1e-5, rtol=1e-5))

    # bf16 operand path (v5e/v6e friendly): f32 accumulation, looser tolerance.
    gamma_bf16 = jax.block_until_ready(
        temporal_decay(delta, W, b, diag=False, compute_dtype=jnp.bfloat16))
    ok &= bool(jnp.allclose(gamma_bf16, _reference(delta, W, b), atol=2e-2, rtol=2e-2))
    ok &= bool(jnp.all(gamma_bf16 > 0.0) and jnp.all(gamma_bf16 <= 1.0))

    print("KERNEL_OK" if ok else "KERNEL_MISMATCH")
</pallas_src>

<mosaic_0001>
module attributes {stable_mosaic.version = 11 : i64} {
  func.func @_dense_kernel(%arg0: i32, %arg1: memref<8x32xf32, #tpu.memory_space<vmem>>, %arg2: memref<32x128xf32, #tpu.memory_space<vmem>>, %arg3: memref<1x128xf32, #tpu.memory_space<vmem>>, %arg4: memref<8x128xf32, #tpu.memory_space<vmem>>) attributes {dimension_semantics = [#tpu.dimension_semantics<parallel>], iteration_bounds = array<i64: 2>, scalar_prefetch = 0 : i64, scratch_operands = 0 : i64, tpu.core_type = #tpu.core_type<tc>, window_params = [{transform_indices = @transform_0, window_bounds = array<i64: 8, 32>}, {pipeline_mode = #tpu.pipeline_mode<synchronous>, transform_indices = @transform_1, window_bounds = array<i64: 32, 128>}, {pipeline_mode = #tpu.pipeline_mode<synchronous>, transform_indices = @transform_2, window_bounds = array<i64: 1, 128>}, {transform_indices = @transform_3, window_bounds = array<i64: 8, 128>}]} {
    %c0 = arith.constant 0 : index
    %c0_0 = arith.constant 0 : index
    %0 = vector.load %arg1[%c0, %c0_0] : memref<8x32xf32, #tpu.memory_space<vmem>>, vector<8x32xf32>
    %c0_1 = arith.constant 0 : index
    %c0_2 = arith.constant 0 : index
    %1 = vector.load %arg2[%c0_1, %c0_2] : memref<32x128xf32, #tpu.memory_space<vmem>>, vector<32x128xf32>
    %cst = arith.constant dense<0.000000e+00> : vector<8x128xf32>
    %2 = tpu.matmul %0, %1, %cst {dimension_numbers = #tpu.dot_dimension_numbers<[1], [0], [0], [1], [0, 0, 1, 1], [], []>} : vector<8x32xf32>, vector<32x128xf32>, vector<8x128xf32> -> vector<8x128xf32>
    %c0_3 = arith.constant 0 : index
    %c0_4 = arith.constant 0 : index
    %3 = vector.load %arg3[%c0_3, %c0_4] : memref<1x128xf32, #tpu.memory_space<vmem>>, vector<1x128xf32>
    %4 = vector.broadcast %3 : vector<1x128xf32> to vector<8x128xf32>
    %5 = arith.addf %2, %4 : vector<8x128xf32>
    %cst_5 = arith.constant 0.000000e+00 : f32
    %6 = vector.broadcast %cst_5 : f32 to vector<8x128xf32>
    %7 = arith.maximumf %5, %6 : vector<8x128xf32>
    %cst_6 = arith.constant 0.000000e+00 : f32
    %8 = vector.broadcast %cst_6 : f32 to vector<8x128xf32>
    %9 = arith.subf %8, %7 : vector<8x128xf32>
    %10 = math.exp %9 : vector<8x128xf32>
    %c0_7 = arith.constant 0 : index
    %c0_8 = arith.constant 0 : index
    %11 = vector.load %arg4[%c0_7, %c0_8] : memref<8x128xf32, #tpu.memory_space<vmem>>, vector<8x128xf32>
    tpu.vector_store %arg4[%c0_7, %c0_8], %10 {strides = array<i32>} : memref<8x128xf32, #tpu.memory_space<vmem>>, vector<8x128xf32>,
    return
  }
  func.func @transform_0(%arg0: i32) -> (i32, i32) {
    %c0_i32 = arith.constant 0 : i32
    %c0_i32_0 = arith.constant 0 : i32
    return %arg0, %c0_i32 : i32, i32
  }
  func.func @transform_1(%arg0: i32) -> (i32, i32) {
    %c0_i32 = arith.constant 0 : i32
    %c0_i32_0 = arith.constant 0 : i32
    %c0_i32_1 = arith.constant 0 : i32
    return %c0_i32, %c0_i32_0 : i32, i32
  }
  func.func @transform_2(%arg0: i32) -> (i32, i32) {
    %c0_i32 = arith.constant 0 : i32
    %c0_i32_0 = arith.constant 0 : i32
    %c0_i32_1 = arith.constant 0 : i32
    return %c0_i32, %c0_i32_0 : i32, i32
  }
  func.func @transform_3(%arg0: i32) -> (i32, i32) {
    %c0_i32 = arith.constant 0 : i32
    %c0_i32_0 = arith.constant 0 : i32
    return %arg0, %c0_i32 : i32, i32
  }
}

</mosaic_0001>

<llo_original>
// kernel: tpu_custom_call.1
$region0: #{tpu_custom_call.1}
  #allocation0 [shape = 'u32[]', space=smem, size = 0x4, offset = 0x4, fixed_abs, tag = 'smem constant byte address 0x4 - core index']
  #allocation1 [shape = 'u32[144,128]{1,0:T(1,128)}', space=vmem, size = 0x12000, scoped, tag = 'internal scratch']
  %s0 = inlined_call_operand.hbm [shape: f32[16,32], index: 0, kind: input, shape index: {}]
  %s1 = inlined_call_operand.hbm [shape: f32[32,128], index: 1, kind: input, shape index: {}]
  %s2 = inlined_call_operand.hbm [shape: f32[1,128], index: 2, kind: input, shape index: {}]
  %s3 = inlined_call_operand.hbm [shape: f32[16,128], index: 3, kind: output, shape index: {}]
  %s4 = sld [smem:[#allocation0]]
  $region57: #{tpu_custom_call.1} parent=0
    _
  %s6 = ssub.s32 1, %s4
  %s7 = scalar_select 0, %s6, %s4
  $region1: #{tpu_custom_call.1} parent=0
    #allocation2 [shape = 'u8[8192]{0}', space=vmem, size = 0x2000, scoped, tag = 'input window, operand 0']
    #allocation3 [shape = 's32[2]{0}', space=sflag, size = 0x8, scoped, tag = 'scoped memory for tpu_custom_call.1']
    #allocation4 [shape = 's32[2]{0}', space=sflag, size = 0x8, scoped, tag = 'scoped memory for tpu_custom_call.1']
    #allocation5 [shape = 'u8[16384]{0}', space=vmem, size = 0x4000, scoped, tag = 'input window, operand 1, single buffered']
    #allocation6 [shape = 's32[1]{0}', space=sflag, size = 0x4, scoped, tag = 'scoped memory for tpu_custom_call.1']
    #allocation7 [shape = 'u8[512]{0}', space=vmem, size = 0x400, scoped, tag = 'input window, operand 2, single buffered']
    #allocation8 [shape = 'u8[8192]{0}', space=vmem, size = 0x2000, scoped, tag = 'output window, operand 0']
    %8 = vsyncpa [#allocation3], 0
    %s9 = scalar_lea.sflag [#allocation3], 1
    %10 = vsyncpa %s9, 0
    %11 = vsyncpa [#allocation6], 0
    %12 = vsyncpa [#allocation4], 0
    %s13 = scalar_lea.sflag [#allocation4], 1
    %14 = vsyncpa %s13, 0
    loop: start=0, step=1, limit=4
    $region2: #{tpu_custom_call.1} parent=1 // loop_pre_header
      _
    $region3: #{tpu_custom_call.1} parent=1 // loop_header
      %s16 = sphi 0, %s20
      %p17 = scmp.ge.s32.totalorder %s16, 4
      %s26 = sphi 0, %s28
      %s29 = sphi 0, %s26
      %s30 = sphi 0, %s29
      %s46 = sphi 0, %s30
      %s50 = sphi 0, %s50
      %s52 = sphi 0, %s50
      %s53 = sphi 0, %s52
      %s67 = sphi 0, %s53
      %s71 = sphi 0, %s71
      %s73 = sphi 0, %s71
      %s74 = sphi 0, %s73
      %s88 = sphi 0, %s74
      %s94 = sphi 0, %s96
      %s97 = sphi 0, %s94
      %s98 = sphi 0, %s97
      %s114 = sphi 0, %s98
    $region4: #{tpu_custom_call.1} parent=1 // loop_header_branch
      %19 = sbr.rel (%p17) target = $region8
    $region5: #{tpu_custom_call.1} parent=1 // loop_body
      %s21 = ssub.s32 %s16, 1
      %s22 = ssub.s32 %s16, 2
      %s23 = sadd.s32 %s16, 1
      %s24 = ssub.s32 %s16, %s23
      %p25 = scmp.eq.s32.totalorder %s24, 0
      %s27 = sadd.s32 %s26, 1
      %s28 = scalar_select %p25, %s26, %s27
      %p31 = pneg %p25
      %p32 = scmp.eq.s32.totalorder %s16, 1
      %p33 = por %p31, %p32
      %p34 = scmp.ne.s32.totalorder %s26, %s29
      %p35 = scmp.eq.s32.totalorder %s16, 0
      %p36 = por %p34, %p35
      %p37 = scmp.ne.s32.totalorder %s26, %s29
      %p38 = scmp.eq.s32.totalorder %s21, 1
      %p39 = por %p37, %p38
      %p40 = scmp.ne.s32.totalorder %s29, %s30
      %p41 = scmp.eq.s32.totalorder %s21, 0
      %p42 = por %p40, %p41
      %p43 = scmp.ne.s32.totalorder %s29, %s30
      %p44 = scmp.eq.s32.totalorder %s22, 1
      %p45 = por %p43, %p44
      %p47 = scmp.ne.s32.totalorder %s30, %s46
      %p48 = scmp.eq.s32.totalorder %s22, 0
      %p49 = por %p47, %p48
      %s51 = sadd.s32 %s50, 1
      %p54 = scmp.eq.s32.totalorder %s16, 1
      %p55 = scmp.ne.s32.totalorder %s50, %s52
      %p56 = scmp.eq.s32.totalorder %s16, 0
      %p57 = por %p55, %p56
      %p58 = scmp.ne.s32.totalorder %s50, %s52
      %p59 = scmp.eq.s32.totalorder %s21, 1
      %p60 = por %p58, %p59
      %p61 = scmp.ne.s32.totalorder %s52, %s53
      %p62 = scmp.eq.s32.totalorder %s21, 0
      %p63 = por %p61, %p62
      %p64 = scmp.ne.s32.totalorder %s52, %s53
      %p65 = scmp.eq.s32.totalorder %s22, 1
      %p66 = por %p64, %p65
      %p68 = scmp.ne.s32.totalorder %s53, %s67
      %p69 = scmp.eq.s32.totalorder %s22, 0
      %p70 = por %p68, %p69
      %s72 = sadd.s32 %s71, 1
      %p75 = scmp.eq.s32.totalorder %s16, 1
      %p76 = scmp.ne.s32.totalorder %s71, %s73
      %p77 = scmp.eq.s32.totalorder %s16, 0
      %p78 = por %p76, %p77
      %p79 = scmp.ne.s32.totalorder %s71, %s73
      %p80 = scmp.eq.s32.totalorder %s21, 1
      %p81 = por %p79, %p80
      %p82 = scmp.ne.s32.totalorder %s73, %s74
      %p83 = scmp.eq.s32.totalorder %s21, 0
      %p84 = por %p82, %p83
      %p85 = scmp.ne.s32.totalorder %s73, %s74
      %p86 = scmp.eq.s32.totalorder %s22, 1
      %p87 = por %p85, %p86
      %p89 = scmp.ne.s32.totalorder %s74, %s88
      %p90 = scmp.eq.s32.totalorder %s22, 0
      %p91 = por %p89, %p90
      %s92 = ssub.s32 %s16, %s23
      %p93 = scmp.eq.s32.totalorder %s92, 0
      %s95 = sadd.s32 %s94, 1
      %s96 = scalar_select %p93, %s94, %s95
      %p99 = pneg %p93
      %p100 = scmp.eq.s32.totalorder %s16, 1
      %p101 = por %p99, %p100
      %p102 = scmp.ne.s32.totalorder %s94, %s97
      %p103 = scmp.eq.s32.totalorder %s16, 0
      %p104 = por %p102, %p103
      %p105 = scmp.ne.s32.totalorder %s94, %s97
      %p106 = scmp.eq.s32.totalorder %s21, 1
      %p107 = por %p105, %p106
      %p108 = scmp.ne.s32.totalorder %s97, %s98
      %p109 = scmp.eq.s32.totalorder %s21, 0
      %p110 = por %p108, %p109
      %p111 = scmp.ne.s32.totalorder %s97, %s98
      %p112 = scmp.eq.s32.totalorder %s22, 1
      %p113 = por %p111, %p112
      %p115 = scmp.ne.s32.totalorder %s98, %s114
      %p116 = scmp.eq.s32.totalorder %s22, 0
      %p117 = por %p115, %p116
      %p118 = scmp.le.s32.totalorder 1, %s16
      %p119 = scmp.lt.s32.totalorder %s16, 3
      %p120 = pnand %p118, %p119
      %p121 = pneg %p120
      // Predicated region
      $region9: #{tpu_custom_call.1} parent=5 // pred_check
        _
      $region10: #{tpu_custom_call.1} parent=5 // pred_check_branch
        %123 = sbr.rel (%p120) target = $region12
      $region11: #{tpu_custom_call.1} parent=5 // pred_region
        %s124 = ssub.s32 %s16, 1
        // Predicated region
        $region13: #{tpu_custom_call.1} parent=11 // pred_check
          %p125 = pneg %p63
        $region14: #{tpu_custom_call.1} parent=11 // pred_check_branch
          %127 = sbr.rel (%p125) target = $region16
        $region15: #{tpu_custom_call.1} parent=11 // pred_region
          %s129 = ssub.s32 512, 512
          %130 = vsyncadd [#allocation6], %s129
          %s131 = sshll.u32 [#allocation5], 4
          %s132 = int_to_ptr.vmem [resolvable:$true] %s131
          %137 = dma.hbm_to_vmem [thread:$0]  %s1, 512, %s132, [#allocation6], 128, 128, 8
        $region16: #{tpu_custom_call.1} parent=11 // pred_fallthru
          _
        // Predicated region
        $region17: #{tpu_custom_call.1} parent=11 // pred_check
          %p138 = pneg %p84
        $region18: #{tpu_custom_call.1} parent=11 // pred_check_branch
          %140 = sbr.rel (%p138) target = $region20
        $region19: #{tpu_custom_call.1} parent=11 // pred_region
          %s142 = ssub.s32 16, 16
          %143 = vsyncadd [#allocation6], %s142
          %s145 = sshll.u32 [#allocation7], 4
          %s146 = int_to_ptr.vmem [resolvable:$true] %s145
          %148 = dma.hbm_to_vmem [thread:$0]  %s2, 16, %s146, [#allocation6]
        $region20: #{tpu_custom_call.1} parent=11 // pred_fallthru
          _
      $region12: #{tpu_custom_call.1} parent=5 // pred_fallthru
        _
      %p149 = scmp.lt.s32.totalorder %s16, 2
      // Predicated region
      $region21: #{tpu_custom_call.1} parent=5 // pred_check
        %p150 = pneg %p149
      $region22: #{tpu_custom_call.1} parent=5 // pred_check_branch
        %152 = sbr.rel (%p150) target = $region24
      $region23: #{tpu_custom_call.1} parent=5 // pred_region
        // Predicated region
        $region25: #{tpu_custom_call.1} parent=23 // pred_check
          %p153 = pneg %p36
        $region26: #{tpu_custom_call.1} parent=23 // pred_check_branch
          %155 = sbr.rel (%p153) target = $region28
        $region27: #{tpu_custom_call.1} parent=23 // pred_region
          %s156 = sand.u32 %s26, 1
          %s157 = scalar_lea.sflag [#allocation3], %s156
          %s158 = sand.u32 %s26, 1
          %s159 = smul.addr %s158, 8
          %s160 = scalar_lea.vmem [#allocation2], %s159
          %s162 = ssub.s32 128, 128
          %163 = vsyncadd %s157, %s162
          %s164 = smul.addr %s16, 128
          %s165 = scalar_lea.hbm %s0, %s164
          %s167 = sshll.u32 %s160, 4
          %s168 = int_to_ptr.vmem [resolvable:$true] %s167
          %170 = dma.hbm_to_vmem [thread:$0]  %s165, 128, %s168, %s157
        $region28: #{tpu_custom_call.1} parent=23 // pred_fallthru
          _
      $region24: #{tpu_custom_call.1} parent=5 // pred_fallthru
        _
      %p171 = scmp.le.s32.totalorder 1, %s16
      %p172 = scmp.lt.s32.totalorder %s16, 3
      %p173 = pnand %p171, %p172
      %p174 = pneg %p173
      // Predicated region
      $region29: #{tpu_custom_call.1} parent=5 // pred_check
        _
      $region30: #{tpu_custom_call.1} parent=5 // pred_check_branch
        %176 = sbr.rel (%p173) target = $region32
      $region31: #{tpu_custom_call.1} parent=5 // pred_region
        %s177 = ssub.s32 %s16, 1
        %s178 = sand.u32 %s29, 1
        %s179 = scalar_lea.sflag [#allocation3], %s178
        %s180 = sand.u32 %s29, 1
        %s181 = smul.addr %s180, 8
        %s182 = scalar_lea.vmem [#allocation2], %s181
        // Predicated region
        $region33: #{tpu_custom_call.1} parent=31 // pred_check
          %p183 = pneg %p42
        $region34: #{tpu_custom_call.1} parent=31 // pred_check_branch
          %185 = sbr.rel (%p183) target = $region36
        $region35: #{tpu_custom_call.1} parent=31 // pred_region
          %186 = dma.done %s179, 128
        $region36: #{tpu_custom_call.1} parent=31 // pred_fallthru
          _
        // Predicated region
        $region37: #{tpu_custom_call.1} parent=31 // pred_check
          %p187 = pneg %p63
        $region38: #{tpu_custom_call.1} parent=31 // pred_check_branch
          %189 = sbr.rel (%p187) target = $region40
        $region39: #{tpu_custom_call.1} parent=31 // pred_region
          %190 = dma.done [#allocation6], 512
        $region40: #{tpu_custom_call.1} parent=31 // pred_fallthru
          _
        // Predicated region
        $region41: #{tpu_custom_call.1} parent=31 // pred_check
          %p191 = pneg %p84
        $region42: #{tpu_custom_call.1} parent=31 // pred_check_branch
          %193 = sbr.rel (%p191) target = $region44
        $region43: #{tpu_custom_call.1} parent=31 // pred_region
          %194 = dma.done [#allocation6], 16
        $region44: #{tpu_custom_call.1} parent=31 // pred_fallthru
          _
        %s195 = sand.u32 %s29, 1
        %s196 = scalar_lea.sflag [#allocation3], %s195
        %s197 = sand.u32 %s29, 1
        %s198 = smul.addr %s197, 8
        %s199 = scalar_lea.vmem [#allocation2], %s198
        %p200 = pneg %p42
        %p201 = pneg %p39
        %p202 = pneg %p63
        %p203 = pneg %p60
        %p204 = pneg %p84
        %p205 = pneg %p81
        %p206 = pneg %p110
        %p207 = pneg %p107
        %s208 = sand.u32 %s97, 1
        %s209 = scalar_lea.sflag [#allocation4], %s208
        %s210 = sand.u32 %s97, 1
        %s211 = smul.addr %s210, 8
        %s212 = scalar_lea.vmem [#allocation8], %s211
        %v213 = vld [vmem:[%s182] sm:$0xff]
        %v214 = vld [vmem:[#allocation5] sm:$0xff]
        %v215 = vld [vmem:[#allocation5 + $0x8] sm:$0xff]
        %v216 = vld [vmem:[#allocation5 + $0x10] sm:$0xff]
        %v217 = vld [vmem:[#allocation5 + $0x18] sm:$0xff]
        %v218 = vld [vmem:[#allocation7] sm:$0x1]
        %v220 = vlaneseq
        %v221 = vshrl.u32 %v220, 7
        %v222 = vsub.s32 0, %v221
        %v223 = vrot.slane %v218, %v222
        %vm225 = vcmask 261120
        %v227 = vsel %vm225, %v213, 0
        %229 = vmatprep.subr.mxu0 0.0
        %230 = vmatpush1.msra.mxu0 %v214
        %231 = vmatprep.subr.mxu0 0.0
        %232 = vmatpush1.msra.mxu0 %v215
        %233 = vmatprep.subr.mxu0 0.0
        %234 = vmatpush1.msra.mxu0 %v216
        %235 = vmatprep.subr.mxu0 0.0
        %236 = vmatpush1.msra.mxu0 %v217
        %237 = vmatprep.subr.mxu0 0.0
        %238 = vmatpush1.msra.mxu0 0.0
        %239 = vmatprep.subr.mxu0 0.0
        %240 = vmatpush1.msra.mxu0 0.0
        %241 = vmatprep.subr.mxu0 0.0
        %242 = vmatpush1.msra.mxu0 0.0
        %243 = vmatprep.subr.mxu0 0.0
        %244 = vmatpush1.msra.mxu0 0.0
        %245 = vmatprep.subr.mxu0 0.0
        %246 = vmatpush1.msra.mxu0 0.0
        %247 = vmatprep.subr.mxu0 0.0
        %248 = vmatpush1.msra.mxu0 0.0
        %249 = vmatprep.subr.mxu0 0.0
        %250 = vmatpush1.msra.mxu0 0.0
        %251 = vmatprep.subr.mxu0 0.0
        %252 = vmatpush1.msra.mxu0 0.0
        %253 = vmatprep.subr.mxu0 0.0
        %254 = vmatpush1.msra.mxu0 0.0
        %255 = vmatprep.subr.mxu0 0.0
        %256 = vmatpush1.msra.mxu0 0.0
        %257 = vmatprep.subr.mxu0 0.0
        %258 = vmatpush1.msra.mxu0 0.0
        %259 = vmatprep.subr.mxu0 0.0
        %260 = vmatpush1.msra.mxu0 0.0
        %261 = vmatprep.subr.mxu0 0.0
        %262 = vmatpush1.msra.mxu0 0.0
        %263 = vmatprep.subr.mxu0 0.0
        %264 = vmatpush1.msra.mxu0 0.0
        %265 = vmatprep.subr.mxu0 0.0
        %266 = vmatpush1.msra.mxu0 0.0
        %267 = vmatprep.subr.mxu0 0.0
        %268 = vmatpush1.msra.mxu0 0.0
        %269 = vmatprep.subr.mxu0 0.0
        %270 = vmatpush1.msra.mxu0 0.0
        %271 = vmatprep.subr.mxu0 0.0
        %272 = vmatpush1.msra.mxu0 0.0
        %273 = vmatprep.subr.mxu0 0.0
        %274 = vmatpush1.msra.mxu0 0.0
        %275 = vmatprep.subr.mxu0 0.0
        %276 = vmatpush1.msra.mxu0 0.0
        %277 = vmatprep.subr.mxu0 0.0
        %278 = vmatpush1.msra.mxu0 0.0
        %279 = vmatprep.subr.mxu0 0.0
        %280 = vmatpush1.msra.mxu0 0.0
        %281 = vmatprep.subr.mxu0 0.0
        %282 = vmatpush1.msra.mxu0 0.0
        %283 = vmatprep.subr.mxu0 0.0
        %284 = vmatpush1.msra.mxu0 0.0
        %285 = vmatprep.subr.mxu0 0.0
        %286 = vmatpush1.msra.mxu0 0.0
        %287 = vmatprep.subr.mxu0 0.0
        %288 = vmatpush1.msra.mxu0 0.0
        %289 = vmatprep.subr.mxu0 0.0
        %290 = vmatpush1.msra.mxu0 0.0
        %291 = vmatprep.subr.mxu0 0.0
        %292 = vmatpush1.msra.mxu0 0.0
        %293 = vmatprep.mubr.f32.mxu0 0.0
        %294 = vmatmul.mubr.f32.gmra.mrb[0].mxu0 %v227
        %v295 = vpop.f32.mrb[0].mxu0
        %v296 = vadd.f32 %v223, %v295
        %v297 = vpop.f32.mrb[0].mxu0
        %298 = vdwg.mxu0
        %v299 = vmax.f32 %v296, 0.0
        %v300 = vsub.f32 0.0, %v299
        %v301 = vmul.f32 %v300, 1.442695
        %v302 = vpow.pop %v301
        %303 = vst [vmem:[%s212] sm:$0xff] %v302
        %s304 = sand.u32 %s97, 1
        %s305 = scalar_lea.sflag [#allocation4], %s304
        %s306 = sand.u32 %s97, 1
        %s307 = smul.addr %s306, 8
        %s308 = scalar_lea.vmem [#allocation8], %s307
        // Predicated region
        $region45: #{tpu_custom_call.1} parent=31 // pred_check
          %p309 = pneg %p107
        $region46: #{tpu_custom_call.1} parent=31 // pred_check_branch
          %311 = sbr.rel (%p309) target = $region48
        $region47: #{tpu_custom_call.1} parent=31 // pred_region
          %s313 = ssub.s32 128, 128
          %314 = vsyncadd %s305, %s313
          %s315 = smul.addr %s21, 128
          %s316 = scalar_lea.hbm %s3, %s315
          %s318 = sshll.u32 %s308, 4
          %s319 = int_to_ptr.vmem [resolvable:$true] %s318
          %321 = dma.vmem_to_hbm [thread:$0]  %s319, 128, %s316, %s305
        $region48: #{tpu_custom_call.1} parent=31 // pred_fallthru
          _
      $region32: #{tpu_custom_call.1} parent=5 // pred_fallthru
        _
      %p322 = scmp.le.s32.totalorder 2, %s16
      // Predicated region
      $region49: #{tpu_custom_call.1} parent=5 // pred_check
        %p323 = pneg %p322
      $region50: #{tpu_custom_call.1} parent=5 // pred_check_branch
        %325 = sbr.rel (%p323) target = $region52
      $region51: #{tpu_custom_call.1} parent=5 // pred_region
        %s326 = ssub.s32 %s16, 2
        // Predicated region
        $region53: #{tpu_custom_call.1} parent=51 // pred_check
          %p327 = pneg %p113
        $region54: #{tpu_custom_call.1} parent=51 // pred_check_branch
          %329 = sbr.rel (%p327) target = $region56
        $region55: #{tpu_custom_call.1} parent=51 // pred_region
          %s330 = sand.u32 %s98, 1
          %s331 = scalar_lea.sflag [#allocation4], %s330
          %s332 = sand.u32 %s98, 1
          %s333 = smul.addr %s332, 8
          %s334 = scalar_lea.vmem [#allocation8], %s333
          %335 = dma.done %s331, 128
        $region56: #{tpu_custom_call.1} parent=51 // pred_fallthru
          _
      $region52: #{tpu_custom_call.1} parent=5 // pred_fallthru
        _
    $region6: #{tpu_custom_call.1} parent=1 // loop_footer
      %s20 = sadd.s32 1, %s16
    $region7: #{tpu_custom_call.1} parent=1 // loop_footer_branch
      %15 = sbr.rel target = $region3
    $region8: #{tpu_custom_call.1} parent=1 // loop_exit
      _
    %336 = vsyncpa [#allocation3], 1
    %s337 = scalar_lea.sflag [#allocation3], 1
    %338 = vsyncpa %s337, 1
    %339 = vsyncpa [#allocation6], 1
    %340 = vsyncpa [#allocation4], 1
    %s341 = scalar_lea.sflag [#allocation4], 1
    %342 = vsyncpa %s341, 1

</llo_original>
